<compile_context>
chip_gen: v7x
topology: tpu7x:2x2x1
jax: 0.10.0
libtpu: 0.0.40
codegen_flags: <defaults>
</compile_context>

<pallas_src>
import functools

import jax
import jax.numpy as jnp
from jax.experimental import pallas as pl
from jax.experimental.pallas import tpu as pltpu

NEG_SLOPE = 0.01  # F.leaky_relu default negative_slope


def _round_up(x, m):
    return ((x + m - 1) // m) * m


# --------------------------------------------------------------------------
# Generation-aware VMEM budgets
# --------------------------------------------------------------------------
def _vmem_budgets():
    """Returns (vmem_limit_bytes, fused_budget_bytes, small_vmem)."""
    try:
        cap = int(pltpu.get_tpu_info().vmem_capacity_bytes)
    except Exception:
        cap = 64 * 1024 * 1024  # conservative (v7x-like) if query unavailable
    if cap >= 100 * 1024 * 1024:   # v5e / v6e: 128 MiB physical VMEM
        return 100 * 1024 * 1024, 80 * 1024 * 1024, False
    # v7x: 64 MiB per TensorCore -> stay well clear of the ceiling
    return 52 * 1024 * 1024, 40 * 1024 * 1024, True


def _choose_tb(B, small_vmem):
    """Batch tile for the fused path: multiple of 8, capped (256 on v7x, 512
    elsewhere), and >=2 grid programs when the batch allows (megacore)."""
    max_tb = 256 if small_vmem else 512
    b8 = _round_up(B, 8)
    if b8 <= 8:
        return 8
    tb = min(max_tb, b8)
    if b8 // tb < 2 and b8 >= 16:
        tb = _round_up(pl.cdiv(b8, 2), 8)
    return tb


# --------------------------------------------------------------------------
# Fused whole-MLP kernel (weights resident in VMEM, activations stay on-chip)
# --------------------------------------------------------------------------
def _fused_mlp_kernel(*refs, num_layers):
    # refs = (x_ref, w0, b0, w1, b1, ..., w_{L-1}, b_{L-1}, o_ref)
    x_ref = refs[0]
    o_ref = refs[-1]
    h = x_ref[...].astype(jnp.float32)
    for li in range(num_layers):
        w = refs[1 + 2 * li][...]          # bf16 resident weight (din_pad, dout_pad)
        b = refs[2 + 2 * li][...]          # f32 (1, dout_pad) bias, broadcasts over rows
        # bf16 MXU operands, f32 accumulation; bias/activation stay f32.
        h = jnp.dot(h.astype(jnp.bfloat16), w,
                    preferred_element_type=jnp.float32) + b
        if li < num_layers - 1:
            h = jnp.maximum(h, NEG_SLOPE * h)
    o_ref[...] = h.astype(o_ref.dtype)


def _fused_fits(tb, dims_pad, x_itemsize, budget):
    # Weights are bf16 and single-buffered (pl.Buffered(1)) -> counted once.
    w_bytes = sum(a * b for a, b in zip(dims_pad[:-1], dims_pad[1:])) * 2
    b_bytes = sum(8 * d for d in dims_pad[1:]) * 4          # f32 (1,d) pads to 8 sublanes
    io_bytes = 2 * tb * (dims_pad[0] + dims_pad[-1]) * x_itemsize  # double-buffered x / out
    live_bytes = 3 * tb * max(dims_pad) * 4                 # f32 intermediates + bf16 dot copy
    return w_bytes + b_bytes + io_bytes + live_bytes <= budget


def _mlp_fused(params, x, dims, dims_pad, tb, vmem_limit):
    B = x.shape[0]
    num_layers = len(params)
    B_pad = _round_up(B, tb)

    x_p = jnp.pad(x, ((0, B_pad - B), (0, dims_pad[0] - dims[0])))
    ins = [x_p]
    in_specs = [pl.BlockSpec((tb, dims_pad[0]), lambda i: (i, 0))]
    for li, (W, bvec) in enumerate(params):
        din, dout = dims[li], dims[li + 1]
        dinp, doutp = dims_pad[li], dims_pad[li + 1]
        W_p = jnp.pad(W, ((0, dinp - din), (0, doutp - dout))).astype(jnp.bfloat16)
        b_p = jnp.pad(bvec, (0, doutp - dout)).astype(jnp.float32).reshape(1, doutp)
        ins += [W_p, b_p]
        in_specs += [
            # Constant index_map -> DMA'd once; single-buffered (no 2x VMEM).
            pl.BlockSpec((dinp, doutp), lambda i: (0, 0), pipeline_mode=pl.Buffered(1)),
            pl.BlockSpec((1, doutp), lambda i: (0, 0), pipeline_mode=pl.Buffered(1)),
        ]

    out_pad = dims_pad[-1]
    grid = (B_pad // tb,)
    kernel = functools.partial(_fused_mlp_kernel, num_layers=num_layers)
    out = pl.pallas_call(
        kernel,
        out_shape=jax.ShapeDtypeStruct((B_pad, out_pad), x.dtype),
        grid_spec=pltpu.PrefetchScalarGridSpec(
            num_scalar_prefetch=0,
            grid=grid,
            in_specs=in_specs,
            out_specs=pl.BlockSpec((tb, out_pad), lambda i: (i, 0)),
        ),
        compiler_params=pltpu.CompilerParams(
            dimension_semantics=("parallel",),
            vmem_limit_bytes=vmem_limit,
        ),
    )(*ins)
    return out[:B, :dims[-1]]


# --------------------------------------------------------------------------
# Tiled per-layer fallback: (M, N, K) grid with f32 accumulator scratch.
# Operates entirely on pre-padded tensors; activations stay padded between
# layers so there are no per-layer pad/slice HBM round-trips.
# --------------------------------------------------------------------------
def _linear_tiled_kernel(x_ref, w_ref, b_ref, o_ref, acc_ref, *, activate):
    k = pl.program_id(2)

    @pl.when(k == 0)
    def _():
        acc_ref[...] = jnp.zeros_like(acc_ref)

    # bf16 MXU operands (w_ref already bf16), f32 accumulation.
    acc_ref[...] += jnp.dot(x_ref[...].astype(jnp.bfloat16), w_ref[...],
                            preferred_element_type=jnp.float32)

    @pl.when(k == pl.num_programs(2) - 1)
    def _():
        out = acc_ref[...] + b_ref[...]          # bias is f32
        if activate:
            out = jnp.maximum(out, NEG_SLOPE * out)
        o_ref[...] = out.astype(o_ref.dtype)


def _linear_tiled_padded(x_p, w_p, b_p, *, activate, tm, tn, tk, vmem_limit):
    """x_p: [B_pad, In_pad] (f32), w_p: [In_pad, Out_pad] (bf16), b_p: [1, Out_pad] (f32).
    All dims already multiples of their tiles. Returns [B_pad, Out_pad]."""
    B_pad, In_pad = x_p.shape
    Out_pad = w_p.shape[1]
    grid = (B_pad // tm, Out_pad // tn, In_pad // tk)
    kernel = functools.partial(_linear_tiled_kernel, activate=activate)
    # TODO(synk): if profiling shows exposed DMA on v7x short-K layers, sweep
    # pipeline_mode=pl.Buffered(3) on the x/w specs below.
    return pl.pallas_call(
        kernel,
        out_shape=jax.ShapeDtypeStruct((B_pad, Out_pad), x_p.dtype),
        grid_spec=pltpu.PrefetchScalarGridSpec(
            num_scalar_prefetch=0,
            grid=grid,
            in_specs=[
                pl.BlockSpec((tm, tk), lambda i, j, k: (i, k)),
                pl.BlockSpec((tk, tn), lambda i, j, k: (k, j)),
                pl.BlockSpec((1, tn), lambda i, j, k: (0, j)),
            ],
            out_specs=pl.BlockSpec((tm, tn), lambda i, j, k: (i, j)),
            scratch_shapes=[pltpu.VMEM((tm, tn), jnp.float32)],
        ),
        compiler_params=pltpu.CompilerParams(
            dimension_semantics=("parallel", "parallel", "arbitrary"),
            vmem_limit_bytes=vmem_limit,
        ),
    )(x_p, w_p, b_p)


def _mlp_tiled(params, x, dims, small_vmem, vmem_limit):
    B = x.shape[0]
    num_layers = len(params)

    # One feature tile per dim (serves as N-tile of the producing layer and
    # K-tile of the consuming layer); pad each dim to a multiple of its tile.
    feat_tile_default = 512
    tiles = [min(feat_tile_default, _round_up(d, 128)) for d in dims]
    dims_pad = [_round_up(d, t) for d, t in zip(dims, tiles)]

    tm_default = 256 if small_vmem else 512
    tm = min(tm_default, _round_up(B, 8))
    B_pad = _round_up(B, tm)

    # Pad activations once; keep them padded (exact zeros) between layers.
    h = jnp.pad(x, ((0, B_pad - B), (0, dims_pad[0] - dims[0])))
    for li, (W, bvec) in enumerate(params):
        din, dout = dims[li], dims[li + 1]
        dinp, doutp = dims_pad[li], dims_pad[li + 1]
        W_p = jnp.pad(W, ((0, dinp - din), (0, doutp - dout))).astype(jnp.bfloat16)
        b_p = jnp.pad(bvec, (0, doutp - dout)).astype(jnp.float32).reshape(1, doutp)
        h = _linear_tiled_padded(
            h, W_p, b_p,
            activate=(li < num_layers - 1),
            tm=tm, tn=tiles[li + 1], tk=tiles[li],
            vmem_limit=vmem_limit,
        )
    return h[:B, :dims[-1]]


# --------------------------------------------------------------------------
# Params + forward
# --------------------------------------------------------------------------
def init_mlp_params(key, input_dim, hidden_dim, output_dim, num_layers):
    """Deterministic param init mirroring PyTorch Linear shapes.

    Returns list of (W [in, out], b [out]) — W is the transpose of torch's weight.
    """
    h = [hidden_dim] * (num_layers - 1)
    dims = list(zip([input_dim] + h, h + [output_dim]))
    params = []
    for (n, k) in dims:
        key, kw, kb = jax.random.split(key, 3)
        bound = 1.0 / jnp.sqrt(n)  # same bound as torch's default uniform init
        W = jax.random.uniform(kw, (n, k), jnp.float32, -bound, bound)
        bvec = jax.random.uniform(kb, (k,), jnp.float32, -bound, bound)
        params.append((W, bvec))
    return params


def mlp_forward(params, x, *, force_tiled=False):
    B, In = x.shape
    dims = [In] + [W.shape[1] for W, _ in params]
    vmem_limit, fused_budget, small_vmem = _vmem_budgets()

    if not force_tiled:
        dims_pad = [_round_up(d, 128) for d in dims]  # lane-dense feature dims
        tb = _choose_tb(B, small_vmem)
        if _fused_fits(tb, dims_pad, x.dtype.itemsize, fused_budget):
            try:
                return _mlp_fused(params, x, dims, dims_pad, tb, vmem_limit)
            except Exception:
                # e.g. VMEM overflow on an edge config: fall back to tiled path.
                pass

    return _mlp_tiled(params, x, dims, small_vmem, vmem_limit)


if __name__ == "__main__":
    # Small shapes consistent with MLP(input_dim, hidden_dim, output_dim, num_layers)
    batch, input_dim, hidden_dim, output_dim, num_layers = 8, 32, 64, 16, 3

    key = jax.random.PRNGKey(0)
    kx, kp = jax.random.split(key)
    x = jax.random.normal(kx, (batch, input_dim), jnp.float32)
    params = init_mlp_params(kp, input_dim, hidden_dim, output_dim, num_layers)

    out = jax.block_until_ready(mlp_forward(params, x))

    # Pure-JAX f32 reference (same math as the PyTorch forward)
    ref = x
    for i, (W, bvec) in enumerate(params):
        ref = ref @ W + bvec
        if i < num_layers - 1:
            ref = jnp.where(ref >= 0, ref, NEG_SLOPE * ref)
    assert out.shape == (batch, output_dim)
    # bf16 MXU operands (f32 accumulation) -> relaxed tolerance vs f32 reference.
    assert jnp.allclose(out, ref, atol=2e-2, rtol=2e-2), float(jnp.max(jnp.abs(out - ref)))

    # Also exercise the tiled fallback path (used when weights exceed the VMEM budget).
    out_tiled = jax.block_until_ready(mlp_forward(params, x, force_tiled=True))
    assert jnp.allclose(out_tiled, ref, atol=2e-2, rtol=2e-2)

    print("KERNEL_OK")
</pallas_src>

<mosaic_0001>
module attributes {stable_mosaic.version = 11 : i64} {
  func.func @_fused_mlp_kernel(%arg0: i32, %arg1: memref<8x128xf32, #tpu.memory_space<vmem>>, %arg2: memref<128x128xbf16, #tpu.memory_space<vmem>>, %arg3: memref<1x128xf32, #tpu.memory_space<vmem>>, %arg4: memref<128x128xbf16, #tpu.memory_space<vmem>>, %arg5: memref<1x128xf32, #tpu.memory_space<vmem>>, %arg6: memref<128x128xbf16, #tpu.memory_space<vmem>>, %arg7: memref<1x128xf32, #tpu.memory_space<vmem>>, %arg8: memref<8x128xf32, #tpu.memory_space<vmem>>) attributes {dimension_semantics = [#tpu.dimension_semantics<parallel>], iteration_bounds = array<i64: 1>, scalar_prefetch = 0 : i64, scratch_operands = 0 : i64, tpu.core_type = #tpu.core_type<tc>, window_params = [{transform_indices = @transform_0, window_bounds = array<i64: 8, 128>}, {pipeline_mode = #tpu.pipeline_mode<synchronous>, transform_indices = @transform_1, window_bounds = array<i64: 128, 128>}, {pipeline_mode = #tpu.pipeline_mode<synchronous>, transform_indices = @transform_2, window_bounds = array<i64: 1, 128>}, {pipeline_mode = #tpu.pipeline_mode<synchronous>, transform_indices = @transform_3, window_bounds = array<i64: 128, 128>}, {pipeline_mode = #tpu.pipeline_mode<synchronous>, transform_indices = @transform_4, window_bounds = array<i64: 1, 128>}, {pipeline_mode = #tpu.pipeline_mode<synchronous>, transform_indices = @transform_5, window_bounds = array<i64: 128, 128>}, {pipeline_mode = #tpu.pipeline_mode<synchronous>, transform_indices = @transform_6, window_bounds = array<i64: 1, 128>}, {transform_indices = @transform_7, window_bounds = array<i64: 8, 128>}]} {
    %c0 = arith.constant 0 : index
    %c0_0 = arith.constant 0 : index
    %0 = vector.load %arg1[%c0, %c0_0] : memref<8x128xf32, #tpu.memory_space<vmem>>, vector<8x128xf32>
    %c0_1 = arith.constant 0 : index
    %c0_2 = arith.constant 0 : index
    %1 = vector.load %arg2[%c0_1, %c0_2] : memref<128x128xbf16, #tpu.memory_space<vmem>>, vector<128x128xbf16>
    %c0_3 = arith.constant 0 : index
    %c0_4 = arith.constant 0 : index
    %2 = vector.load %arg3[%c0_3, %c0_4] : memref<1x128xf32, #tpu.memory_space<vmem>>, vector<1x128xf32>
    %3 = arith.truncf %0 : vector<8x128xf32> to vector<8x128xbf16>
    %cst = arith.constant dense<0.000000e+00> : vector<8x128xf32>
    %4 = tpu.matmul %3, %1, %cst {dimension_numbers = #tpu.dot_dimension_numbers<[1], [0], [0], [1], [0, 0, 1, 1], [], []>} : vector<8x128xbf16>, vector<128x128xbf16>, vector<8x128xf32> -> vector<8x128xf32>
    %5 = vector.broadcast %2 : vector<1x128xf32> to vector<8x128xf32>
    %6 = arith.addf %4, %5 : vector<8x128xf32>
    %cst_5 = arith.constant 0.00999999977 : f32
    %7 = vector.broadcast %cst_5 : f32 to vector<8x128xf32>
    %8 = arith.mulf %7, %6 : vector<8x128xf32>
    %9 = arith.maximumf %6, %8 : vector<8x128xf32>
    %c0_6 = arith.constant 0 : index
    %c0_7 = arith.constant 0 : index
    %10 = vector.load %arg4[%c0_6, %c0_7] : memref<128x128xbf16, #tpu.memory_space<vmem>>, vector<128x128xbf16>
    %c0_8 = arith.constant 0 : index
    %c0_9 = arith.constant 0 : index
    %11 = vector.load %arg5[%c0_8, %c0_9] : memref<1x128xf32, #tpu.memory_space<vmem>>, vector<1x128xf32>
    %12 = arith.truncf %9 : vector<8x128xf32> to vector<8x128xbf16>
    %cst_10 = arith.constant dense<0.000000e+00> : vector<8x128xf32>
    %13 = tpu.matmul %12, %10, %cst_10 {dimension_numbers = #tpu.dot_dimension_numbers<[1], [0], [0], [1], [0, 0, 1, 1], [], []>} : vector<8x128xbf16>, vector<128x128xbf16>, vector<8x128xf32> -> vector<8x128xf32>
    %14 = vector.broadcast %11 : vector<1x128xf32> to vector<8x128xf32>
    %15 = arith.addf %13, %14 : vector<8x128xf32>
    %cst_11 = arith.constant 0.00999999977 : f32
    %16 = vector.broadcast %cst_11 : f32 to vector<8x128xf32>
    %17 = arith.mulf %16, %15 : vector<8x128xf32>
    %18 = arith.maximumf %15, %17 : vector<8x128xf32>
    %c0_12 = arith.constant 0 : index
    %c0_13 = arith.constant 0 : index
    %19 = vector.load %arg6[%c0_12, %c0_13] : memref<128x128xbf16, #tpu.memory_space<vmem>>, vector<128x128xbf16>
    %c0_14 = arith.constant 0 : index
    %c0_15 = arith.constant 0 : index
    %20 = vector.load %arg7[%c0_14, %c0_15] : memref<1x128xf32, #tpu.memory_space<vmem>>, vector<1x128xf32>
    %21 = arith.truncf %18 : vector<8x128xf32> to vector<8x128xbf16>
    %cst_16 = arith.constant dense<0.000000e+00> : vector<8x128xf32>
    %22 = tpu.matmul %21, %19, %cst_16 {dimension_numbers = #tpu.dot_dimension_numbers<[1], [0], [0], [1], [0, 0, 1, 1], [], []>} : vector<8x128xbf16>, vector<128x128xbf16>, vector<8x128xf32> -> vector<8x128xf32>
    %23 = vector.broadcast %20 : vector<1x128xf32> to vector<8x128xf32>
    %24 = arith.addf %22, %23 : vector<8x128xf32>
    %c0_17 = arith.constant 0 : index
    %c0_18 = arith.constant 0 : index
    %25 = vector.load %arg8[%c0_17, %c0_18] : memref<8x128xf32, #tpu.memory_space<vmem>>, vector<8x128xf32>
    tpu.vector_store %arg8[%c0_17, %c0_18], %24 {strides = array<i32>} : memref<8x128xf32, #tpu.memory_space<vmem>>, vector<8x128xf32>,
    return
  }
  func.func @transform_0(%arg0: i32) -> (i32, i32) {
    %c0_i32 = arith.constant 0 : i32
    %c0_i32_0 = arith.constant 0 : i32
    return %arg0, %c0_i32 : i32, i32
  }
  func.func @transform_1(%arg0: i32) -> (i32, i32) {
    %c0_i32 = arith.constant 0 : i32
    %c0_i32_0 = arith.constant 0 : i32
    %c0_i32_1 = arith.constant 0 : i32
    return %c0_i32, %c0_i32_0 : i32, i32
  }
  func.func @transform_2(%arg0: i32) -> (i32, i32) {
    %c0_i32 = arith.constant 0 : i32
    %c0_i32_0 = arith.constant 0 : i32
    %c0_i32_1 = arith.constant 0 : i32
    return %c0_i32, %c0_i32_0 : i32, i32
  }
  func.func @transform_3(%arg0: i32) -> (i32, i32) {
    %c0_i32 = arith.constant 0 : i32
    %c0_i32_0 = arith.constant 0 : i32
    %c0_i32_1 = arith.constant 0 : i32
    return %c0_i32, %c0_i32_0 : i32, i32
  }
  func.func @transform_4(%arg0: i32) -> (i32, i32) {
    %c0_i32 = arith.constant 0 : i32
    %c0_i32_0 = arith.constant 0 : i32
    %c0_i32_1 = arith.constant 0 : i32
    return %c0_i32, %c0_i32_0 : i32, i32
  }
  func.func @transform_5(%arg0: i32) -> (i32, i32) {
    %c0_i32 = arith.constant 0 : i32
    %c0_i32_0 = arith.constant 0 : i32
    %c0_i32_1 = arith.constant 0 : i32
    return %c0_i32, %c0_i32_0 : i32, i32
  }
  func.func @transform_6(%arg0: i32) -> (i32, i32) {
    %c0_i32 = arith.constant 0 : i32
    %c0_i32_0 = arith.constant 0 : i32
    %c0_i32_1 = arith.constant 0 : i32
    return %c0_i32, %c0_i32_0 : i32, i32
  }
  func.func @transform_7(%arg0: i32) -> (i32, i32) {
    %c0_i32 = arith.constant 0 : i32
    %c0_i32_0 = arith.constant 0 : i32
    return %arg0, %c0_i32 : i32, i32
  }
}

module attributes {stable_mosaic.version = 11 : i64} {
  func.func @_linear_tiled_kernel(%arg0: i32, %arg1: i32, %arg2: i32, %arg3: memref<8x128xf32, #tpu.memory_space<vmem>>, %arg4: memref<128x128xbf16, #tpu.memory_space<vmem>>, %arg5: memref<1x128xf32, #tpu.memory_space<vmem>>, %arg6: memref<8x128xf32, #tpu.memory_space<vmem>>, %arg7: memref<8x128xf32, #tpu.memory_space<vmem>>) attributes {dimension_semantics = [#tpu.dimension_semantics<parallel>, #tpu.dimension_semantics<parallel>, #tpu.dimension_semantics<arbitrary>], iteration_bounds = array<i64: 1, 1, 1>, scalar_prefetch = 0 : i64, scratch_operands = 1 : i64, tpu.core_type = #tpu.core_type<tc>, window_params = [{transform_indices = @transform_0, window_bounds = array<i64: 8, 128>}, {transform_indices = @transform_1, window_bounds = array<i64: 128, 128>}, {transform_indices = @transform_2, window_bounds = array<i64: 1, 128>}, {transform_indices = @transform_3, window_bounds = array<i64: 8, 128>}]} {
    %c0_i32 = arith.constant 0 : i32
    %0 = arith.cmpi eq, %arg2, %c0_i32 : i32
    %1 = arith.extui %0 : i1 to i32
    %c0_i32_0 = arith.constant 0 : i32
    %2 = arith.cmpi ne, %1, %c0_i32_0 : i32
    scf.if %2 {
      %cst_10 = arith.constant 0.000000e+00 : f32
      %13 = vector.broadcast %cst_10 : f32 to vector<8x128xf32>
      %c0_11 = arith.constant 0 : index
      %c0_12 = arith.constant 0 : index
      %14 = vector.load %arg7[%c0_11, %c0_12] : memref<8x128xf32, #tpu.memory_space<vmem>>, vector<8x128xf32>
      tpu.vector_store %arg7[%c0_11, %c0_12], %13 {strides = array<i32>} : memref<8x128xf32, #tpu.memory_space<vmem>>, vector<8x128xf32>,
    } else {
    }
    %c0 = arith.constant 0 : index
    %c0_1 = arith.constant 0 : index
    %3 = vector.load %arg7[%c0, %c0_1] : memref<8x128xf32, #tpu.memory_space<vmem>>, vector<8x128xf32>
    %c0_2 = arith.constant 0 : index
    %c0_3 = arith.constant 0 : index
    %4 = vector.load %arg3[%c0_2, %c0_3] : memref<8x128xf32, #tpu.memory_space<vmem>>, vector<8x128xf32>
    %5 = arith.truncf %4 : vector<8x128xf32> to vector<8x128xbf16>
    %c0_4 = arith.constant 0 : index
    %c0_5 = arith.constant 0 : index
    %6 = vector.load %arg4[%c0_4, %c0_5] : memref<128x128xbf16, #tpu.memory_space<vmem>>, vector<128x128xbf16>
    %cst = arith.constant dense<0.000000e+00> : vector<8x128xf32>
    %7 = tpu.matmul %5, %6, %cst {dimension_numbers = #tpu.dot_dimension_numbers<[1], [0], [0], [1], [0, 0, 1, 1], [], []>} : vector<8x128xbf16>, vector<128x128xbf16>, vector<8x128xf32> -> vector<8x128xf32>
    %8 = arith.addf %3, %7 : vector<8x128xf32>
    %c0_6 = arith.constant 0 : index
    %c0_7 = arith.constant 0 : index
    %9 = vector.load %arg7[%c0_6, %c0_7] : memref<8x128xf32, #tpu.memory_space<vmem>>, vector<8x128xf32>
    tpu.vector_store %arg7[%c0_6, %c0_7], %8 {strides = array<i32>} : memref<8x128xf32, #tpu.memory_space<vmem>>, vector<8x128xf32>,
    %c0_i32_8 = arith.constant 0 : i32
    %10 = arith.cmpi eq, %arg2, %c0_i32_8 : i32
    %11 = arith.extui %10 : i1 to i32
    %c0_i32_9 = arith.constant 0 : i32
    %12 = arith.cmpi ne, %11, %c0_i32_9 : i32
    scf.if %12 {
      %c0_10 = arith.constant 0 : index
      %c0_11 = arith.constant 0 : index
      %13 = vector.load %arg7[%c0_10, %c0_11] : memref<8x128xf32, #tpu.memory_space<vmem>>, vector<8x128xf32>
      %c0_12 = arith.constant 0 : index
      %c0_13 = arith.constant 0 : index
      %14 = vector.load %arg5[%c0_12, %c0_13] : memref<1x128xf32, #tpu.memory_space<vmem>>, vector<1x128xf32>
      %15 = vector.broadcast %14 : vector<1x128xf32> to vector<8x128xf32>
      %16 = arith.addf %13, %15 : vector<8x128xf32>
      %cst_14 = arith.constant 0.00999999977 : f32
      %17 = vector.broadcast %cst_14 : f32 to vector<8x128xf32>
      %18 = arith.mulf %17, %16 : vector<8x128xf32>
      %19 = arith.maximumf %16, %18 : vector<8x128xf32>
      %c0_15 = arith.constant 0 : index
      %c0_16 = arith.constant 0 : index
      %20 = vector.load %arg6[%c0_15, %c0_16] : memref<8x128xf32, #tpu.memory_space<vmem>>, vector<8x128xf32>
      tpu.vector_store %arg6[%c0_15, %c0_16], %19 {strides = array<i32>} : memref<8x128xf32, #tpu.memory_space<vmem>>, vector<8x128xf32>,
    } else {
    }
    return
  }
  func.func @transform_0(%arg0: i32, %arg1: i32, %arg2: i32) -> (i32, i32) {
    %c0_i32 = arith.constant 0 : i32
    return %arg0, %arg2 : i32, i32
  }
  func.func @transform_1(%arg0: i32, %arg1: i32, %arg2: i32) -> (i32, i32) {
    %c0_i32 = arith.constant 0 : i32
    return %arg2, %arg1 : i32, i32
  }
  func.func @transform_2(%arg0: i32, %arg1: i32, %arg2: i32) -> (i32, i32) {
    %c0_i32 = arith.constant 0 : i32
    %c0_i32_0 = arith.constant 0 : i32
    return %c0_i32, %arg1 : i32, i32
  }
  func.func @transform_3(%arg0: i32, %arg1: i32, %arg2: i32) -> (i32, i32) {
    %c0_i32 = arith.constant 0 : i32
    return %arg0, %arg1 : i32, i32
  }
}

</mosaic_0001>

<llo_original>
// kernel: tpu_custom_call.1
$region0: #{tpu_custom_call.1}
  #allocation0 [shape = 'u32[]', space=smem, size = 0x4, offset = 0x4, fixed_abs, tag = 'smem constant byte address 0x4 - core index']
  #allocation1 [shape = 'u32[144,128]{1,0:T(1,128)}', space=vmem, size = 0x12000, scoped, tag = 'internal scratch']
  %s0 = inlined_call_operand.hbm [shape: f32[8,128], index: 0, kind: input, shape index: {}]
  %s1 = inlined_call_operand.hbm [shape: bf16[128,128], index: 1, kind: input, shape index: {}]
  %s2 = inlined_call_operand.vmem [shape: f32[1,128], index: 2, kind: input, shape index: {}]
  %s3 = inlined_call_operand.hbm [shape: bf16[128,128], index: 3, kind: input, shape index: {}]
  %s4 = inlined_call_operand.vmem [shape: f32[1,128], index: 4, kind: input, shape index: {}]
  %s5 = inlined_call_operand.hbm [shape: bf16[128,128], index: 5, kind: input, shape index: {}]
  %s6 = inlined_call_operand.vmem [shape: f32[1,128], index: 6, kind: input, shape index: {}]
  %s7 = inlined_call_operand.hbm [shape: f32[8,128], index: 7, kind: output, shape index: {}]
  %s8 = sld [smem:[#allocation0]]
  $region54: #{tpu_custom_call.1} parent=0
    _
  %s10 = ssub.s32 1, %s8
  %s11 = scalar_select 0, %s10, %s8
  $region1: #{tpu_custom_call.1} parent=0
    #allocation2 [shape = 'u8[4096]{0}', space=vmem, size = 0x1000, scoped, tag = 'input window, operand 0, single buffered']
    #allocation3 [shape = 's32[1]{0}', space=sflag, size = 0x4, scoped, tag = 'scoped memory for tpu_custom_call.1']
    #allocation4 [shape = 's32[1]{0}', space=sflag, size = 0x4, scoped, tag = 'scoped memory for tpu_custom_call.1']
    #allocation5 [shape = 'u8[32768]{0}', space=vmem, size = 0x8000, scoped, tag = 'input window, operand 1, single buffered']
    #allocation6 [shape = 's32[1]{0}', space=sflag, size = 0x4, scoped, tag = 'scoped memory for tpu_custom_call.1']
    #allocation7 [shape = 'u8[32768]{0}', space=vmem, size = 0x8000, scoped, tag = 'input window, operand 3, single buffered']
    #allocation8 [shape = 'u8[32768]{0}', space=vmem, size = 0x8000, scoped, tag = 'input window, operand 5, single buffered']
    #allocation9 [shape = 's32[1]{0}', space=sflag, size = 0x4, scoped, tag = 'scoped memory for tpu_custom_call.1']
    #allocation10 [shape = 'u8[4096]{0}', space=vmem, size = 0x1000, scoped, tag = 'output window, operand 0, single buffered']
    %12 = vsyncpa [#allocation3], 0
    %13 = vsyncpa [#allocation6], 0
    %14 = vsyncpa [#allocation9], 0
    %15 = vsyncpa [#allocation4], 0
    // Predicated region
    $region2: #{tpu_custom_call.1} parent=1 // pred_check
      _
    $region3: #{tpu_custom_call.1} parent=1 // pred_check_branch
      %17 = sbr.rel (0) target = $region5
    $region4: #{tpu_custom_call.1} parent=1 // pred_region
      %s19 = ssub.s32 128, 128
      %20 = vsyncadd [#allocation3], %s19
      %s22 = sshll.u32 [#allocation2], 4
      %s23 = int_to_ptr.vmem [resolvable:$true] %s22
      %25 = dma.hbm_to_vmem [thread:$0]  %s0, 128, %s23, [#allocation3]
    $region5: #{tpu_custom_call.1} parent=1 // pred_fallthru
      _
    // Predicated region
    $region6: #{tpu_custom_call.1} parent=1 // pred_check
      _
    $region7: #{tpu_custom_call.1} parent=1 // pred_check_branch
      %27 = sbr.rel (0) target = $region9
    $region8: #{tpu_custom_call.1} parent=1 // pred_region
      %s29 = ssub.s32 1024, 1024
      %30 = vsyncadd [#allocation6], %s29
      %s31 = sshll.u32 [#allocation5], 4
      %s32 = int_to_ptr.vmem [resolvable:$true] %s31
      %37 = dma.hbm_to_vmem [thread:$0]  %s1, 1024, %s32, [#allocation6], 64, 64, 4
    $region9: #{tpu_custom_call.1} parent=1 // pred_fallthru
      _
    // Predicated region
    $region10: #{tpu_custom_call.1} parent=1 // pred_check
      _
    $region11: #{tpu_custom_call.1} parent=1 // pred_check_branch
      %39 = sbr.rel (0) target = $region13
    $region12: #{tpu_custom_call.1} parent=1 // pred_region
      _
    $region13: #{tpu_custom_call.1} parent=1 // pred_fallthru
      _
    // Predicated region
    $region14: #{tpu_custom_call.1} parent=1 // pred_check
      _
    $region15: #{tpu_custom_call.1} parent=1 // pred_check_branch
      %41 = sbr.rel (0) target = $region17
    $region16: #{tpu_custom_call.1} parent=1 // pred_region
      %s43 = ssub.s32 1024, 1024
      %44 = vsyncadd [#allocation6], %s43
      %s45 = sshll.u32 [#allocation7], 4
      %s46 = int_to_ptr.vmem [resolvable:$true] %s45
      %51 = dma.hbm_to_vmem [thread:$0]  %s3, 1024, %s46, [#allocation6], 64, 64, 4
    $region17: #{tpu_custom_call.1} parent=1 // pred_fallthru
      _
    // Predicated region
    $region18: #{tpu_custom_call.1} parent=1 // pred_check
      _
    $region19: #{tpu_custom_call.1} parent=1 // pred_check_branch
      %53 = sbr.rel (0) target = $region21
    $region20: #{tpu_custom_call.1} parent=1 // pred_region
      _
    $region21: #{tpu_custom_call.1} parent=1 // pred_fallthru
      _
    // Predicated region
    $region22: #{tpu_custom_call.1} parent=1 // pred_check
      _
    $region23: #{tpu_custom_call.1} parent=1 // pred_check_branch
      %55 = sbr.rel (0) target = $region25
    $region24: #{tpu_custom_call.1} parent=1 // pred_region
      %s57 = ssub.s32 1024, 1024
      %58 = vsyncadd [#allocation9], %s57
      %s59 = sshll.u32 [#allocation8], 4
      %s60 = int_to_ptr.vmem [resolvable:$true] %s59
      %65 = dma.hbm_to_vmem [thread:$0]  %s5, 1024, %s60, [#allocation9], 64, 64, 4
    $region25: #{tpu_custom_call.1} parent=1 // pred_fallthru
      _
    // Predicated region
    $region26: #{tpu_custom_call.1} parent=1 // pred_check
      _
    $region27: #{tpu_custom_call.1} parent=1 // pred_check_branch
      %67 = sbr.rel (0) target = $region29
    $region28: #{tpu_custom_call.1} parent=1 // pred_region
      _
    $region29: #{tpu_custom_call.1} parent=1 // pred_fallthru
      _
    // Predicated region
    $region30: #{tpu_custom_call.1} parent=1 // pred_check
      _
    $region31: #{tpu_custom_call.1} parent=1 // pred_check_branch
      %69 = sbr.rel (0) target = $region33
    $region32: #{tpu_custom_call.1} parent=1 // pred_region
      %70 = dma.done [#allocation3], 128
    $region33: #{tpu_custom_call.1} parent=1 // pred_fallthru
      _
    // Predicated region
    $region34: #{tpu_custom_call.1} parent=1 // pred_check
      _
    $region35: #{tpu_custom_call.1} parent=1 // pred_check_branch
      %72 = sbr.rel (0) target = $region37
    $region36: #{tpu_custom_call.1} parent=1 // pred_region
      %73 = dma.done [#allocation6], 1024
    $region37: #{tpu_custom_call.1} parent=1 // pred_fallthru
      _
    // Predicated region
    $region38: #{tpu_custom_call.1} parent=1 // pred_check
      _
    $region39: #{tpu_custom_call.1} parent=1 // pred_check_branch
      %75 = sbr.rel (0) target = $region41
    $region40: #{tpu_custom_call.1} parent=1 // pred_region
      %76 = dma.done [#allocation6], 1024
    $region41: #{tpu_custom_call.1} parent=1 // pred_fallthru
      _
    // Predicated region
    $region42: #{tpu_custom_call.1} parent=1 // pred_check
      _
    $region43: #{tpu_custom_call.1} parent=1 // pred_check_branch
      %78 = sbr.rel (0) target = $region45
    $region44: #{tpu_custom_call.1} parent=1 // pred_region
      %79 = dma.done [#allocation9], 1024
    $region45: #{tpu_custom_call.1} parent=1 // pred_fallthru
      _
    %v81 = vld [vmem:[#allocation2] sm:$0xff]
    %v82 = vld [vmem:[#allocation5] sm:$0xf]
    %v83 = vld [vmem:[#allocation5 + $0x4] sm:$0xf]
    %v84 = vld [vmem:[#allocation5 + $0x8] sm:$0xf]
    %v85 = vld [vmem:[#allocation5 + $0xc] sm:$0xf]
    %v86 = vld [vmem:[#allocation5 + $0x10] sm:$0xf]
    %v87 = vld [vmem:[#allocation5 + $0x14] sm:$0xf]
    %v88 = vld [vmem:[#allocation5 + $0x18] sm:$0xf]
    %v89 = vld [vmem:[#allocation5 + $0x1c] sm:$0xf]
    %v90 = vld [vmem:[#allocation5 + $0x20] sm:$0xf]
    %v91 = vld [vmem:[#allocation5 + $0x24] sm:$0xf]
    %v92 = vld [vmem:[#allocation5 + $0x28] sm:$0xf]
    %v93 = vld [vmem:[#allocation5 + $0x2c] sm:$0xf]
    %v94 = vld [vmem:[#allocation5 + $0x30] sm:$0xf]
    %v95 = vld [vmem:[#allocation5 + $0x34] sm:$0xf]
    %v96 = vld [vmem:[#allocation5 + $0x38] sm:$0xf]
    %v97 = vld [vmem:[#allocation5 + $0x3c] sm:$0xf]
    %v98 = vld [vmem:[%s2] sm:$0x1]
    %v99 = vpack.c.bf16 %v81, %v81
    %v101 = vlaneseq
    %v102 = vshrl.u32 %v101, 7
    %v103 = vsub.s32 0, %v102
    %v104 = vrot.slane %v98, %v103
    %v122 = vunpack.c.l.b16 %v82
    %v123 = vunpack.c.l.b16 %v83
    %v124 = vunpack.c.l.b16 %v84
    %v125 = vunpack.c.l.b16 %v85
    %v126 = vunpack.c.l.b16 %v86
    %v127 = vunpack.c.l.b16 %v87
    %v128 = vunpack.c.l.b16 %v88
    %v129 = vunpack.c.l.b16 %v89
    %v130 = vunpack.c.l.b16 %v90
    %v131 = vunpack.c.l.b16 %v91
    %v132 = vunpack.c.l.b16 %v92
    %v133 = vunpack.c.l.b16 %v93
    %v134 = vunpack.c.l.b16 %v94
    %v135 = vunpack.c.l.b16 %v95
    %v136 = vunpack.c.l.b16 %v96
    %v137 = vunpack.c.l.b16 %v97
    %v138 = vpack.c.b16 %v123, %v122
    %v139 = vpack.c.b16 %v125, %v124
    %v140 = vpack.c.b16 %v127, %v126
    %v141 = vpack.c.b16 %v129, %v128
    %v142 = vpack.c.b16 %v131, %v130
    %v143 = vpack.c.b16 %v133, %v132
    %v144 = vpack.c.b16 %v135, %v134
    %v145 = vpack.c.b16 %v137, %v136
    %154 = vmatprep.subr.bf16.mxu0 0
    %155 = vmatpush1.bf16.msra.mxu0 %v138
    %156 = vmatprep.subr.bf16.mxu0 0
    %157 = vmatpush1.bf16.msra.mxu0 %v139
    %158 = vmatprep.subr.bf16.mxu0 0
    %159 = vmatpush1.bf16.msra.mxu0 %v140
    %160 = vmatprep.subr.bf16.mxu0 0
    %161 = vmatpush1.bf16.msra.mxu0 %v141
    %162 = vmatprep.subr.bf16.mxu0 0
    %163 = vmatpush1.bf16.msra.mxu0 %v142
    %164 = vmatprep.subr.bf16.mxu0 0
    %165 = vmatpush1.bf16.msra.mxu0 %v143
    %166 = vmatprep.subr.bf16.mxu0 0
    %167 = vmatpush1.bf16.msra.mxu0 %v144
    %168 = vmatprep.subr.bf16.mxu0 0
    %169 = vmatpush1.bf16.msra.mxu0 %v145
    %170 = vmatprep.subr.bf16.mxu0 0
    %171 = vmatpush1.bf16.msra.mxu0 0
    %172 = vmatprep.subr.bf16.mxu0 0
    %173 = vmatpush1.bf16.msra.mxu0 0
    %174 = vmatprep.subr.bf16.mxu0 0
    %175 = vmatpush1.bf16.msra.mxu0 0
    %176 = vmatprep.subr.bf16.mxu0 0
    %177 = vmatpush1.bf16.msra.mxu0 0
    %178 = vmatprep.subr.bf16.mxu0 0
    %179 = vmatpush1.bf16.msra.mxu0 0
    %180 = vmatprep.subr.bf16.mxu0 0
    %181 = vmatpush1.bf16.msra.mxu0 0
    %182 = vmatprep.subr.bf16.mxu0 0
    %183 = vmatpush1.bf16.msra.mxu0 0
    %184 = vmatprep.subr.bf16.mxu0 0
    %185 = vmatpush1.bf16.msra.mxu0 0
    %186 = vmatprep.mubr.bf16.mxu0 0
    %187 = vmatmul.mubr.bf16.gmra.mrb[0].mxu0 %v99
    %v188 = vpop.f32.mrb[0].mxu0
    %v189 = vadd.f32 %v104, %v188
    %v190 = vpop.f32.mrb[0].mxu0
    %v191 = vpop.f32.mrb[0].mxu0
    %v192 = vpop.f32.mrb[0].mxu0
    %193 = vdwg.mxu0
    %v194 = vmul.f32 %v189, 0.01
    %v195 = vmax.f32 %v189, %v194
    %v196 = vld [vmem:[#allocation7] sm:$0xf]
    %v197 = vld [vmem:[#allocation7 + $0x4] sm:$0xf]
    %v198 = vld [vmem:[#allocation7 + $0x8] sm:$0xf]
    %v199 = vld [vmem:[#allocation7 + $0xc] sm:$0xf]
    %v200 = vld [vmem:[#allocation7 + $0x10] sm:$0xf]
    %v201 = vld [vmem:[#allocation7 + $0x14] sm:$0xf]
    %v202 = vld [vmem:[#allocation7 + $0x18] sm:$0xf]
    %v203 = vld [vmem:[#allocation7 + $0x1c] sm:$0xf]
    %v204 = vld [vmem:[#allocation7 + $0x20] sm:$0xf]
    %v205 = vld [vmem:[#allocation7 + $0x24] sm:$0xf]
    %v206 = vld [vmem:[#allocation7 + $0x28] sm:$0xf]
    %v207 = vld [vmem:[#allocation7 + $0x2c] sm:$0xf]
    %v208 = vld [vmem:[#allocation7 + $0x30] sm:$0xf]
    %v209 = vld [vmem:[#allocation7 + $0x34] sm:$0xf]
    %v210 = vld [vmem:[#allocation7 + $0x38] sm:$0xf]
    %v211 = vld [vmem:[#allocation7 + $0x3c] sm:$0xf]
    %v212 = vld [vmem:[%s4] sm:$0x1]
    %v213 = vpack.c.bf16 %v195, %v195
    %v215 = vlaneseq
    %v216 = vshrl.u32 %v215, 7
    %v217 = vsub.s32 0, %v216
    %v218 = vrot.slane %v212, %v217
    %v236 = vunpack.c.l.b16 %v196
    %v237 = vunpack.c.l.b16 %v197
    %v238 = vunpack.c.l.b16 %v198
    %v239 = vunpack.c.l.b16 %v199
    %v240 = vunpack.c.l.b16 %v200
    %v241 = vunpack.c.l.b16 %v201
    %v242 = vunpack.c.l.b16 %v202
    %v243 = vunpack.c.l.b16 %v203
    %v244 = vunpack.c.l.b16 %v204
    %v245 = vunpack.c.l.b16 %v205
    %v246 = vunpack.c.l.b16 %v206
    %v247 = vunpack.c.l.b16 %v207
    %v248 = vunpack.c.l.b16 %v208
    %v249 = vunpack.c.l.b16 %v209
    %v250 = vunpack.c.l.b16 %v210
    %v251 = vunpack.c.l.b16 %v211
    %v252 = vpack.c.b16 %v237, %v236
    %v253 = vpack.c.b16 %v239, %v238
    %v254 = vpack.c.b16 %v241, %v240
    %v255 = vpack.c.b16 %v243, %v242
    %v256 = vpack.c.b16 %v245, %v244
    %v257 = vpack.c.b16 %v247, %v246
    %v258 = vpack.c.b16 %v249, %v248
    %v259 = vpack.c.b16 %v251, %v250
    %268 = vmatprep.subr.bf16.mxu0 0
    %269 = vmatpush1.bf16.msra.mxu0 %v252
    %270 = vmatprep.subr.bf16.mxu0 0
    %271 = vmatpush1.bf16.msra.mxu0 %v253
    %272 = vmatprep.subr.bf16.mxu0 0
    %273 = vmatpush1.bf16.msra.mxu0 %v254
    %274 = vmatprep.subr.bf16.mxu0 0
    %275 = vmatpush1.bf16.msra.mxu0 %v255
    %276 = vmatprep.subr.bf16.mxu0 0
    %277 = vmatpush1.bf16.msra.mxu0 %v256
    %278 = vmatprep.subr.bf16.mxu0 0
    %279 = vmatpush1.bf16.msra.mxu0 %v257
    %280 = vmatprep.subr.bf16.mxu0 0
    %281 = vmatpush1.bf16.msra.mxu0 %v258
    %282 = vmatprep.subr.bf16.mxu0 0
    %283 = vmatpush1.bf16.msra.mxu0 %v259
    %284 = vmatprep.subr.bf16.mxu0 0
    %285 = vmatpush1.bf16.msra.mxu0 0
    %286 = vmatprep.subr.bf16.mxu0 0
    %287 = vmatpush1.bf16.msra.mxu0 0
    %288 = vmatprep.subr.bf16.mxu0 0
    %289 = vmatpush1.bf16.msra.mxu0 0
    %290 = vmatprep.subr.bf16.mxu0 0
    %291 = vmatpush1.bf16.msra.mxu0 0
    %292 = vmatprep.subr.bf16.mxu0 0
    %293 = vmatpush1.bf16.msra.mxu0 0
    %294 = vmatprep.subr.bf16.mxu0 0
    %295 = vmatpush1.bf16.msra.mxu0 0
    %296 = vmatprep.subr.bf16.mxu0 0
    %297 = vmatpush1.bf16.msra.mxu0 0
    %298 = vmatprep.subr.bf16.mxu0 0
    %299 = vmatpush1.bf16.msra.mxu0 0
    %300 = vmatprep.mubr.bf16.mxu0 0
    %301 = vmatmul.mubr.bf16.gmra.mrb[0].mxu0 %v213
    %v302 = vpop.f32.mrb[0].mxu0
    %v303 = vadd.f32 %v218, %v302
    %v304 = vpop.f32.mrb[0].mxu0
    %v305 = vpop.f32.mrb[0].mxu0
    %v306 = vpop.f32.mrb[0].mxu0
    %307 = vdwg.mxu0
    %v308 = vmul.f32 %v303, 0.01
    %v309 = vmax.f32 %v303, %v308
    %v310 = vld [vmem:[#allocation8] sm:$0xf]
    %v311 = vld [vmem:[#allocation8 + $0x4] sm:$0xf]
    %v312 = vld [vmem:[#allocation8 + $0x8] sm:$0xf]
    %v313 = vld [vmem:[#allocation8 + $0xc] sm:$0xf]
    %v314 = vld [vmem:[#allocation8 + $0x10] sm:$0xf]
    %v315 = vld [vmem:[#allocation8 + $0x14] sm:$0xf]
    %v316 = vld [vmem:[#allocation8 + $0x18] sm:$0xf]
    %v317 = vld [vmem:[#allocation8 + $0x1c] sm:$0xf]
    %v318 = vld [vmem:[#allocation8 + $0x20] sm:$0xf]
    %v319 = vld [vmem:[#allocation8 + $0x24] sm:$0xf]
    %v320 = vld [vmem:[#allocation8 + $0x28] sm:$0xf]
    %v321 = vld [vmem:[#allocation8 + $0x2c] sm:$0xf]
    %v322 = vld [vmem:[#allocation8 + $0x30] sm:$0xf]
    %v323 = vld [vmem:[#allocation8 + $0x34] sm:$0xf]
    %v324 = vld [vmem:[#allocation8 + $0x38] sm:$0xf]
    %v325 = vld [vmem:[#allocation8 + $0x3c] sm:$0xf]
    %v326 = vld [vmem:[%s6] sm:$0x1]
    %v327 = vpack.c.bf16 %v309, %v309
    %v329 = vlaneseq
    %v330 = vshrl.u32 %v329, 7
    %v331 = vsub.s32 0, %v330
    %v332 = vrot.slane %v326, %v331
    %v350 = vunpack.c.l.b16 %v310
    %v351 = vunpack.c.l.b16 %v311
    %v352 = vunpack.c.l.b16 %v312
    %v353 = vunpack.c.l.b16 %v313
    %v354 = vunpack.c.l.b16 %v314
    %v355 = vunpack.c.l.b16 %v315
    %v356 = vunpack.c.l.b16 %v316
    %v357 = vunpack.c.l.b16 %v317
    %v358 = vunpack.c.l.b16 %v318
    %v359 = vunpack.c.l.b16 %v319
    %v360 = vunpack.c.l.b16 %v320
    %v361 = vunpack.c.l.b16 %v321
    %v362 = vunpack.c.l.b16 %v322
    %v363 = vunpack.c.l.b16 %v323
    %v364 = vunpack.c.l.b16 %v324
    %v365 = vunpack.c.l.b16 %v325
    %v366 = vpack.c.b16 %v351, %v350
    %v367 = vpack.c.b16 %v353, %v352
    %v368 = vpack.c.b16 %v355, %v354
    %v369 = vpack.c.b16 %v357, %v356
    %v370 = vpack.c.b16 %v359, %v358
    %v371 = vpack.c.b16 %v361, %v360
    %v372 = vpack.c.b16 %v363, %v362
    %v373 = vpack.c.b16 %v365, %v364
    %382 = vmatprep.subr.bf16.mxu0 0
    %383 = vmatpush1.bf16.msra.mxu0 %v366
    %384 = vmatprep.subr.bf16.mxu0 0
    %385 = vmatpush1.bf16.msra.mxu0 %v367
    %386 = vmatprep.subr.bf16.mxu0 0
    %387 = vmatpush1.bf16.msra.mxu0 %v368
    %388 = vmatprep.subr.bf16.mxu0 0
    %389 = vmatpush1.bf16.msra.mxu0 %v369
    %390 = vmatprep.subr.bf16.mxu0 0
    %391 = vmatpush1.bf16.msra.mxu0 %v370
    %392 = vmatprep.subr.bf16.mxu0 0
    %393 = vmatpush1.bf16.msra.mxu0 %v371
    %394 = vmatprep.subr.bf16.mxu0 0
    %395 = vmatpush1.bf16.msra.mxu0 %v372
    %396 = vmatprep.subr.bf16.mxu0 0
    %397 = vmatpush1.bf16.msra.mxu0 %v373
    %398 = vmatprep.subr.bf16.mxu0 0
    %399 = vmatpush1.bf16.msra.mxu0 0
    %400 = vmatprep.subr.bf16.mxu0 0
    %401 = vmatpush1.bf16.msra.mxu0 0
    %402 = vmatprep.subr.bf16.mxu0 0
    %403 = vmatpush1.bf16.msra.mxu0 0
    %404 = vmatprep.subr.bf16.mxu0 0
    %405 = vmatpush1.bf16.msra.mxu0 0
    %406 = vmatprep.subr.bf16.mxu0 0
    %407 = vmatpush1.bf16.msra.mxu0 0
    %408 = vmatprep.subr.bf16.mxu0 0
    %409 = vmatpush1.bf16.msra.mxu0 0
    %410 = vmatprep.subr.bf16.mxu0 0
    %411 = vmatpush1.bf16.msra.mxu0 0
    %412 = vmatprep.subr.bf16.mxu0 0
    %413 = vmatpush1.bf16.msra.mxu0 0
    %414 = vmatprep.mubr.bf16.mxu0 0
    %415 = vmatmul.mubr.bf16.gmra.mrb[0].mxu0 %v327
    %v416 = vpop.f32.mrb[0].mxu0
    %v417 = vadd.f32 %v332, %v416
    %v418 = vpop.f32.mrb[0].mxu0
    %v419 = vpop.f32.mrb[0].mxu0
    %v420 = vpop.f32.mrb[0].mxu0
    %421 = vdwg.mxu0
    %422 = vst [vmem:[#allocation10] sm:$0xff] %v417
    // Predicated region
    $region46: #{tpu_custom_call.1} parent=1 // pred_check
      _
    $region47: #{tpu_custom_call.1} parent=1 // pred_check_branch
      %424 = sbr.rel (0) target = $region49
    $region48: #{tpu_custom_call.1} parent=1 // pred_region
      %s426 = ssub.s32 128, 128
      %427 = vsyncadd [#allocation4], %s426
      %s429 = sshll.u32 [#allocation10], 4
      %s430 = int_to_ptr.vmem [resolvable:$true] %s429
      %432 = dma.vmem_to_hbm [thread:$0]  %s430, 128, %s7, [#allocation4]
    $region49: #{tpu_custom_call.1} parent=1 // pred_fallthru
      _
    // Predicated region
    $region50: #{tpu_custom_call.1} parent=1 // pred_check
      _
    $region51: #{tpu_custom_call.1} parent=1 // pred_check_branch
      %434 = sbr.rel (0) target = $region53
    $region52: #{tpu_custom_call.1} parent=1 // pred_region
      %435 = dma.done [#allocation4], 128
    $region53: #{tpu_custom_call.1} parent=1 // pred_fallthru
      _
    %436 = vsyncpa [#allocation3], 1
    %437 = vsyncpa [#allocation6], 1
    %438 = vsyncpa [#allocation9], 1
    %439 = vsyncpa [#allocation4], 1

// kernel: tpu_custom_call.1
$region0: #{tpu_custom_call.1}
  #allocation0 [shape = 'u32[]', space=smem, size = 0x4, offset = 0x4, fixed_abs, tag = 'smem constant byte address 0x4 - core index']
  #allocation1 [shape = 'u32[144,128]{1,0:T(1,128)}', space=vmem, size = 0x12000, scoped, tag = 'internal scratch']
  #allocation2 [shape = 'f32[8,128]{1,0:T(8,128)}', space=vmem, size = 0x1000, scoped, tag = 'scratch operand']
  %s0 = inlined_call_operand.hbm [shape: f32[8,128], index: 0, kind: input, shape index: {}]
  %s1 = inlined_call_operand.hbm [shape: bf16[128,128], index: 1, kind: input, shape index: {}]
  %s2 = inlined_call_operand.vmem [shape: f32[1,128], index: 2, kind: input, shape index: {}]
  %s3 = inlined_call_operand.hbm [shape: f32[8,128], index: 3, kind: output, shape index: {}]
  %s4 = sld [smem:[#allocation0]]
  $region38: #{tpu_custom_call.1} parent=0
    _
  %s6 = ssub.s32 1, %s4
  %s7 = scalar_select 0, %s6, %s4
  $region1: #{tpu_custom_call.1} parent=0
    #allocation3 [shape = 'u8[4096]{0}', space=vmem, size = 0x1000, scoped, tag = 'input window, operand 0, single buffered']
    #allocation4 [shape = 's32[1]{0}', space=sflag, size = 0x4, scoped, tag = 'scoped memory for tpu_custom_call.1']
    #allocation5 [shape = 's32[1]{0}', space=sflag, size = 0x4, scoped, tag = 'scoped memory for tpu_custom_call.1']
    #allocation6 [shape = 'u8[32768]{0}', space=vmem, size = 0x8000, scoped, tag = 'input window, operand 1, single buffered']
    #allocation7 [shape = 's32[1]{0}', space=sflag, size = 0x4, scoped, tag = 'scoped memory for tpu_custom_call.1']
    #allocation8 [shape = 'u8[4096]{0}', space=vmem, size = 0x1000, scoped, tag = 'output window, operand 0, single buffered']
    %8 = vsyncpa [#allocation4], 0
    %9 = vsyncpa [#allocation7], 0
    %10 = vsyncpa [#allocation5], 0
    // Predicated region
    $region2: #{tpu_custom_call.1} parent=1 // pred_check
      _
    $region3: #{tpu_custom_call.1} parent=1 // pred_check_branch
      %12 = sbr.rel (0) target = $region5
    $region4: #{tpu_custom_call.1} parent=1 // pred_region
      %s14 = ssub.s32 128, 128
      %15 = vsyncadd [#allocation4], %s14
      %s17 = sshll.u32 [#allocation3], 4
      %s18 = int_to_ptr.vmem [resolvable:$true] %s17
      %20 = dma.hbm_to_vmem [thread:$0]  %s0, 128, %s18, [#allocation4]
    $region5: #{tpu_custom_call.1} parent=1 // pred_fallthru
      _
    // Predicated region
    $region6: #{tpu_custom_call.1} parent=1 // pred_check
      _
    $region7: #{tpu_custom_call.1} parent=1 // pred_check_branch
      %22 = sbr.rel (0) target = $region9
    $region8: #{tpu_custom_call.1} parent=1 // pred_region
      %s24 = ssub.s32 1024, 1024
      %25 = vsyncadd [#allocation7], %s24
      %s26 = sshll.u32 [#allocation6], 4
      %s27 = int_to_ptr.vmem [resolvable:$true] %s26
      %32 = dma.hbm_to_vmem [thread:$0]  %s1, 1024, %s27, [#allocation7], 64, 64, 4
    $region9: #{tpu_custom_call.1} parent=1 // pred_fallthru
      _
    // Predicated region
    $region10: #{tpu_custom_call.1} parent=1 // pred_check
      _
    $region11: #{tpu_custom_call.1} parent=1 // pred_check_branch
      %34 = sbr.rel (0) target = $region13
    $region12: #{tpu_custom_call.1} parent=1 // pred_region
      _
    $region13: #{tpu_custom_call.1} parent=1 // pred_fallthru
      _
    // Predicated region
    $region14: #{tpu_custom_call.1} parent=1 // pred_check
      _
    $region15: #{tpu_custom_call.1} parent=1 // pred_check_branch
      %36 = sbr.rel (0) target = $region17
    $region16: #{tpu_custom_call.1} parent=1 // pred_region
      %37 = dma.done [#allocation4], 128
    $region17: #{tpu_custom_call.1} parent=1 // pred_fallthru
      _
    // Predicated region
    $region18: #{tpu_custom_call.1} parent=1 // pred_check
      _
    $region19: #{tpu_custom_call.1} parent=1 // pred_check_branch
      %39 = sbr.rel (0) target = $region21
    $region20: #{tpu_custom_call.1} parent=1 // pred_region
      %40 = dma.done [#allocation7], 1024
    $region21: #{tpu_custom_call.1} parent=1 // pred_fallthru
      _
    %p42 = scmp.eq.s32.totalorder 0, 0
    // Predicated region
    $region22: #{tpu_custom_call.1} parent=1 // pred_check
      %p43 = pneg %p42
    $region23: #{tpu_custom_call.1} parent=1 // pred_check_branch
      %45 = sbr.rel (%p43) target = $region25
    $region24: #{tpu_custom_call.1} parent=1 // pred_region
      %46 = vst [vmem:[#allocation2] sm:$0xff] 0.0
    $region25: #{tpu_custom_call.1} parent=1 // pred_fallthru
      _
    %v47 = vld [vmem:[#allocation2] sm:$0xff]
    %v48 = vld [vmem:[#allocation3] sm:$0xff]
    %v49 = vpack.c.bf16 %v48, %v48
    %v50 = vld [vmem:[#allocation6] sm:$0xf]
    %v51 = vld [vmem:[#allocation6 + $0x4] sm:$0xf]
    %v52 = vld [vmem:[#allocation6 + $0x8] sm:$0xf]
    %v53 = vld [vmem:[#allocation6 + $0xc] sm:$0xf]
    %v54 = vld [vmem:[#allocation6 + $0x10] sm:$0xf]
    %v55 = vld [vmem:[#allocation6 + $0x14] sm:$0xf]
    %v56 = vld [vmem:[#allocation6 + $0x18] sm:$0xf]
    %v57 = vld [vmem:[#allocation6 + $0x1c] sm:$0xf]
    %v58 = vld [vmem:[#allocation6 + $0x20] sm:$0xf]
    %v59 = vld [vmem:[#allocation6 + $0x24] sm:$0xf]
    %v60 = vld [vmem:[#allocation6 + $0x28] sm:$0xf]
    %v61 = vld [vmem:[#allocation6 + $0x2c] sm:$0xf]
    %v62 = vld [vmem:[#allocation6 + $0x30] sm:$0xf]
    %v63 = vld [vmem:[#allocation6 + $0x34] sm:$0xf]
    %v64 = vld [vmem:[#allocation6 + $0x38] sm:$0xf]
    %v65 = vld [vmem:[#allocation6 + $0x3c] sm:$0xf]
    %v82 = vunpack.c.l.b16 %v50
    %v83 = vunpack.c.l.b16 %v51
    %v84 = vunpack.c.l.b16 %v52
    %v85 = vunpack.c.l.b16 %v53
    %v86 = vunpack.c.l.b16 %v54
    %v87 = vunpack.c.l.b16 %v55
    %v88 = vunpack.c.l.b16 %v56
    %v89 = vunpack.c.l.b16 %v57
    %v90 = vunpack.c.l.b16 %v58
    %v91 = vunpack.c.l.b16 %v59
    %v92 = vunpack.c.l.b16 %v60
    %v93 = vunpack.c.l.b16 %v61
    %v94 = vunpack.c.l.b16 %v62
    %v95 = vunpack.c.l.b16 %v63
    %v96 = vunpack.c.l.b16 %v64
    %v97 = vunpack.c.l.b16 %v65
    %v98 = vpack.c.b16 %v83, %v82
    %v99 = vpack.c.b16 %v85, %v84
    %v100 = vpack.c.b16 %v87, %v86
    %v101 = vpack.c.b16 %v89, %v88
    %v102 = vpack.c.b16 %v91, %v90
    %v103 = vpack.c.b16 %v93, %v92
    %v104 = vpack.c.b16 %v95, %v94
    %v105 = vpack.c.b16 %v97, %v96
    %114 = vmatprep.subr.bf16.mxu0 0
    %115 = vmatpush1.bf16.msra.mxu0 %v98
    %116 = vmatprep.subr.bf16.mxu0 0
    %117 = vmatpush1.bf16.msra.mxu0 %v99
    %118 = vmatprep.subr.bf16.mxu0 0
    %119 = vmatpush1.bf16.msra.mxu0 %v100
    %120 = vmatprep.subr.bf16.mxu0 0
    %121 = vmatpush1.bf16.msra.mxu0 %v101
    %122 = vmatprep.subr.bf16.mxu0 0
    %123 = vmatpush1.bf16.msra.mxu0 %v102
    %124 = vmatprep.subr.bf16.mxu0 0
    %125 = vmatpush1.bf16.msra.mxu0 %v103
    %126 = vmatprep.subr.bf16.mxu0 0
    %127 = vmatpush1.bf16.msra.mxu0 %v104
    %128 = vmatprep.subr.bf16.mxu0 0
    %129 = vmatpush1.bf16.msra.mxu0 %v105
    %130 = vmatprep.subr.bf16.mxu0 0
    %131 = vmatpush1.bf16.msra.mxu0 0
    %132 = vmatprep.subr.bf16.mxu0 0
    %133 = vmatpush1.bf16.msra.mxu0 0
    %134 = vmatprep.subr.bf16.mxu0 0
    %135 = vmatpush1.bf16.msra.mxu0 0
    %136 = vmatprep.subr.bf16.mxu0 0
    %137 = vmatpush1.bf16.msra.mxu0 0
    %138 = vmatprep.subr.bf16.mxu0 0
    %139 = vmatpush1.bf16.msra.mxu0 0
    %140 = vmatprep.subr.bf16.mxu0 0
    %141 = vmatpush1.bf16.msra.mxu0 0
    %142 = vmatprep.subr.bf16.mxu0 0
    %143 = vmatpush1.bf16.msra.mxu0 0
    %144 = vmatprep.subr.bf16.mxu0 0
    %145 = vmatpush1.bf16.msra.mxu0 0
    %146 = vmatprep.mubr.bf16.mxu0 0
    %147 = vmatmul.mubr.bf16.gmra.mrb[0].mxu0 %v49
    %v148 = vpop.f32.mrb[0].mxu0
    %v149 = vadd.f32 0.0, %v148
    %v150 = vpop.f32.mrb[0].mxu0
    %v151 = vpop.f32.mrb[0].mxu0
    %v152 = vpop.f32.mrb[0].mxu0
    %153 = vdwg.mxu0
    %v154 = vadd.f32 %v47, %v149
    %155 = vst [vmem:[#allocation2] sm:$0xff] %v154
    // Predicated region
    $region26: #{tpu_custom_call.1} parent=1 // pred_check
      %p156 = pneg %p42
    $region27: #{tpu_custom_call.1} parent=1 // pred_check_branch
      %158 = sbr.rel (%p156) target = $region29
    $region28: #{tpu_custom_call.1} parent=1 // pred_region
      %v159 = vld [vmem:[#allocation2] sm:$0xff]
      %v160 = vld [vmem:[%s2] sm:$0x1]
      %v162 = vlaneseq
      %v163 = vshrl.u32 %v162, 7
      %v164 = vsub.s32 0, %v163
      %v165 = vrot.slane %v160, %v164
      %v167 = vadd.f32 %v159, %v165
      %v168 = vmul.f32 %v167, 0.01
      %v169 = vmax.f32 %v167, %v168
      %170 = vst [vmem:[#allocation8] sm:$0xff] %v169
    $region29: #{tpu_custom_call.1} parent=1 // pred_fallthru
      _
    // Predicated region
    $region30: #{tpu_custom_call.1} parent=1 // pred_check
      _
    $region31: #{tpu_custom_call.1} parent=1 // pred_check_branch
      %172 = sbr.rel (0) target = $region33
    $region32: #{tpu_custom_call.1} parent=1 // pred_region
      %s174 = ssub.s32 128, 128
      %175 = vsyncadd [#allocation5], %s174
      %s177 = sshll.u32 [#allocation8], 4
      %s178 = int_to_ptr.vmem [resolvable:$true] %s177
      %180 = dma.vmem_to_hbm [thread:$0]  %s178, 128, %s3, [#allocation5]
    $region33: #{tpu_custom_call.1} parent=1 // pred_fallthru
      _
    // Predicated region
    $region34: #{tpu_custom_call.1} parent=1 // pred_check
      _
    $region35: #{tpu_custom_call.1} parent=1 // pred_check_branch
      %182 = sbr.rel (0) target = $region37
    $region36: #{tpu_custom_call.1} parent=1 // pred_region
      %183 = dma.done [#allocation5], 128
    $region37: #{tpu_custom_call.1} parent=1 // pred_fallthru
      _
    %184 = vsyncpa [#allocation4], 1
    %185 = vsyncpa [#allocation7], 1
    %186 = vsyncpa [#allocation5], 1

</llo_original>
